<compile_context>
chip_gen: v7x
topology: tpu7x:2x2x1
jax: 0.10.0
libtpu: 0.0.40
codegen_flags: <defaults>
</compile_context>

<pallas_src>
import functools
import math

import jax
import jax.numpy as jnp
from jax.experimental import pallas as pl
from jax.experimental.pallas import tpu as pltpu


# -----------------------------------------------------------------------------
# Fused kernel builder
# -----------------------------------------------------------------------------
def _make_fused_kernel(n_steps, tile_rows, mel_rows, n_pairs, include_conv, include_f0):
    needs_mask = (n_steps * tile_rows) != mel_rows
    n_small = n_pairs + (2 if include_f0 else 0)

    def kernel(*refs):
        pos = 0
        orig_ref = refs[pos]; pos += 1
        rec_ref = refs[pos]; pos += 1
        conv_ref = None
        if include_conv:
            conv_ref = refs[pos]; pos += 1
        enc_refs = refs[pos:pos + n_pairs]; pos += n_pairs
        emb_refs = refs[pos:pos + n_pairs]; pos += n_pairs
        if include_f0:
            f0o_ref = refs[pos]; f0c_ref = refs[pos + 1]; pos += 2
        out_ref = refs[pos]

        i = pl.program_id(0)

        # --- streaming mel tile: `original` tile read once, reused for both terms
        o = orig_ref[...].astype(jnp.float32)
        d_rec = rec_ref[...].astype(jnp.float32) - o
        d_conv = conv_ref[...].astype(jnp.float32) - o if include_conv else None

        def mel_sums(mask):
            dr = d_rec if mask is None else jnp.where(mask, d_rec, 0.0)
            s_rec = jnp.sum(dr * dr)
            s_conv = None
            if include_conv:
                dc = d_conv if mask is None else jnp.where(mask, d_conv, 0.0)
                s_conv = jnp.sum(jnp.abs(dc))
            return s_rec, s_conv

        def small_sums():
            vals = []
            for p in range(n_pairs):
                de = (emb_refs[p][...].astype(jnp.float32)
                      - enc_refs[p][...].astype(jnp.float32))
                vals.append(jnp.sum(de * de))
            if include_f0:
                fo = f0o_ref[...].astype(jnp.float32)
                fc = f0c_ref[...].astype(jnp.float32)
                voiced = (fo >= 80.0).astype(jnp.float32)
                vals.append(jnp.sum(voiced))
                vals.append(jnp.sum(jnp.abs(fc - fo) * voiced))
            return vals

        def write(s_rec, s_conv, smalls):
            # Build one dense (8, 128) f32 block with the scalar sums on row 0.
            vals = [s_rec]
            if include_conv:
                vals.append(s_conv)
            vals += smalls
            row = jax.lax.broadcasted_iota(jnp.int32, (8, 128), 0)
            lane = jax.lax.broadcasted_iota(jnp.int32, (8, 128), 1)
            blk = jnp.zeros((8, 128), jnp.float32)
            for j, v in enumerate(vals):
                if isinstance(v, (int, float)) and v == 0.0:
                    continue
                blk = jnp.where(jnp.logical_and(row == 0, lane == j),
                                jnp.asarray(v, jnp.float32), blk)
            out_ref[0] = blk

        zeros_small = [0.0] * n_small

        if n_steps == 1:
            s_rec, s_conv = mel_sums(None)
            write(s_rec, s_conv, small_sums())
        else:
            last = n_steps - 1

            @pl.when(i == 0)
            def _first():
                # Small resident tensors reduced once, hidden under tile-1 prefetch.
                s_rec, s_conv = mel_sums(None)
                write(s_rec, s_conv, small_sums())

            @pl.when(jnp.logical_and(i > 0, i < last))
            def _interior():
                # Lean steady-state path: no mask, no small-tensor work.
                s_rec, s_conv = mel_sums(None)
                write(s_rec, s_conv, zeros_small)

            @pl.when(i == last)
            def _last():
                if needs_mask:
                    # Mask BEFORE any reduction: OOB padding rows are undefined.
                    row_ids = jax.lax.broadcasted_iota(jnp.int32, d_rec.shape, 0)
                    mask = (row_ids + i * tile_rows) < mel_rows
                else:
                    mask = None
                s_rec, s_conv = mel_sums(mask)
                write(s_rec, s_conv, zeros_small)

    return kernel


def _const_spec(shape):
    nd = len(shape)
    return pl.BlockSpec(shape, lambda i, _nd=nd: (0,) * _nd)


@functools.lru_cache(maxsize=None)
def _build_fused_call(mel_shape, mel_dtype, pair_shapes, pair_dtypes,
                      f0_shape, f0_dtype, include_conv):
    rows, T = mel_shape
    itemsize = jnp.dtype(mel_dtype).itemsize
    mel_inputs = 2 + int(include_conv)

    # Native sublane packing granularity: 8 rows f32, 16 bf16, 32 int8/fp8.
    pack = max(8, 32 // max(1, itemsize))

    # ~4 MiB per mel input tile keeps the fixed per-grid-step cost (~0.35 us)
    # at a few % of the DMA time on all generations; 3 inputs x 2 buffers x 4 MiB
    # = 24 MiB, covered by the explicit vmem_limit below (v5e default is only 16 MiB).
    TILE_BUDGET = 4 * 1024 * 1024
    max_rows_budget = max(pack, TILE_BUDGET // max(1, T * itemsize))
    if rows <= max_rows_budget:
        tile_rows, n_steps = rows, 1
    else:
        tile_rows = max(pack, (max_rows_budget // pack) * pack)
        n_steps = -(-rows // tile_rows)

    n_pairs = len(pair_shapes)
    include_f0 = f0_shape is not None
    n_out = 1 + int(include_conv) + n_pairs + (2 if include_f0 else 0)
    assert n_out <= 128, "too many scalar outputs for one lane row"

    kernel = _make_fused_kernel(n_steps, tile_rows, rows, n_pairs,
                                include_conv, include_f0)

    mel_spec = pl.BlockSpec((tile_rows, T), lambda i: (i, 0))
    in_specs = [mel_spec, mel_spec]
    if include_conv:
        in_specs.append(mel_spec)
    for shp in pair_shapes:            # encodings
        in_specs.append(_const_spec(shp))
    for shp in pair_shapes:            # embeddings
        in_specs.append(_const_spec(shp))
    if include_f0:
        in_specs += [_const_spec(f0_shape), _const_spec(f0_shape)]

    # Explicit VMEM budget: double-buffered streaming tiles + resident smalls.
    const_bytes = 0
    for shp, dt in zip(pair_shapes, pair_dtypes):
        const_bytes += 2 * math.prod(shp) * jnp.dtype(dt).itemsize      # enc + emb
    if include_f0:
        const_bytes += 2 * math.prod(f0_shape) * jnp.dtype(f0_dtype).itemsize
    vmem_needed = (2 * mel_inputs * tile_rows * T * itemsize
                   + 2 * const_bytes + 2 * 8 * 128 * 4)
    vmem_limit = int(min(56 * 1024 * 1024,
                         max(32 * 1024 * 1024, vmem_needed + (2 << 20))))

    # Advisory cost: memory-bound streaming reduction (helps XLA overlap it).
    mel_bytes = mel_inputs * rows * T * itemsize
    cost = pl.CostEstimate(
        flops=5 * rows * T + 3 * max(1, const_bytes // 4),
        transcendentals=0,
        bytes_accessed=mel_bytes + const_bytes + n_steps * 8 * 128 * 4,
    )

    call = pl.pallas_call(
        kernel,
        out_shape=jax.ShapeDtypeStruct((n_steps, 8, 128), jnp.float32),
        grid=(n_steps,),
        in_specs=in_specs,
        out_specs=pl.BlockSpec((1, 8, 128), lambda i: (i, 0, 0)),
        compiler_params=pltpu.CompilerParams(
            dimension_semantics=("parallel",),   # per-step partials -> megacore-safe
            vmem_limit_bytes=vmem_limit,
        ),
        cost_estimate=cost,
    )
    return jax.jit(call)


# -----------------------------------------------------------------------------
# Forward pass (mirrors PerceptualVqVaeVcLoss.forward, forward values only).
# -----------------------------------------------------------------------------
def default_loss_weights():
    return {
        "reconstruction_loss": 1.0,
        "codebook_loss": 1.0,
        "commitment_loss": 0.25,
        "f0_consistency_loss": 0.5,
        "mel_diversification_loss": 0.5,
        "f0_diversification_loss": 0.5,
        # External-model losses kept at 0 (untranslatable without checkpoints).
        "formant_mse_loss": 0.0,
        "mos_loss": 0.0,
        "codec_loss": 0.0,
        "WavLM_loss": 0.0,
        "vgg_loss": 0.0,
        "F0_loss": 0.0,
    }


def default_lce():
    return {k: 0 for k in default_loss_weights()}


def perceptual_vqvae_vc_loss(
    original,
    reconstruction,
    conversion,
    encodings,
    embeddings,
    f0_original,
    f0_reconstruction,   # accepted for API parity; unused (see f0_consistency note)
    f0_conversion,
    current_epoch,
    loss_weights=None,
    lce=None,
):
    loss_weights = loss_weights or default_loss_weights()
    lce = lce or default_lce()
    assert loss_weights["reconstruction_loss"] > 0.0

    # The reference wraps single tensors into a list (buggily); we do it correctly.
    if not isinstance(encodings, (list, tuple)):
        encodings = [encodings]
    if not isinstance(embeddings, (list, tuple)):
        embeddings = [embeddings]
    assert len(encodings) == len(embeddings)

    B, M, T = original.shape
    rows = B * M
    include_conv = loss_weights["mel_diversification_loss"] > 0.0 and conversion is not None
    include_f0 = loss_weights["f0_diversification_loss"] > 0.0

    # Zero-copy leading-dim merge; native dtype preserved (cast happens in-kernel).
    args = [jnp.reshape(original, (rows, T)), jnp.reshape(reconstruction, (rows, T))]
    if include_conv:
        args.append(jnp.reshape(conversion, (rows, T)))
    args += list(encodings) + list(embeddings)
    if include_f0:
        args += [f0_original, f0_conversion]

    pair_shapes = tuple(tuple(int(s) for s in e.shape) for e in encodings)
    pair_dtypes = tuple(str(e.dtype) for e in encodings)
    f0_shape = tuple(int(s) for s in f0_original.shape) if include_f0 else None
    f0_dtype = str(f0_original.dtype) if include_f0 else None

    call = _build_fused_call((rows, T), str(original.dtype), pair_shapes, pair_dtypes,
                             f0_shape, f0_dtype, include_conv)
    partials = call(*args)                      # (n_steps, 8, 128) per-step partials
    sums = jnp.sum(partials[:, 0, :], axis=0)   # (128,) per-quantity totals

    n_mel = float(rows * T)
    reconstruction_loss = sums[0] / n_mel
    k = 1
    if include_conv:
        mel_diversification_loss = -(sums[1] / n_mel)
        k = 2
    else:
        mel_diversification_loss = 0.0

    # codebook / commitment forward values are both MSE(embedding, encoding);
    # detach() only changes gradients (no custom VJP is provided here).
    codebook_loss = 0.0
    commitment_loss = 0.0
    for p, enc in enumerate(encodings):
        mse = sums[k + p] / float(enc.size)
        codebook_loss = codebook_loss + mse
        commitment_loss = commitment_loss + mse

    # Reference bug reproduced: the normalized-L1 f0 consistency value is computed
    # into a local variable and never assigned, so the returned value is 0.0.
    f0_consistency_loss = 0.0

    if include_f0:
        voiced_count = sums[k + len(encodings)]
        voiced_abs = sums[k + len(encodings) + 1]
        # NOTE: like the reference, this is NaN if no frame is voiced (empty mean).
        f0_diversification_loss = -(voiced_abs / voiced_count)
    else:
        f0_diversification_loss = 0.0

    loss_dict = {
        "reconstruction_loss": loss_weights["reconstruction_loss"] * reconstruction_loss,
        "codebook_loss": loss_weights["codebook_loss"] * codebook_loss,
        "commitment_loss": loss_weights["commitment_loss"] * commitment_loss,
        "mel_diversification_loss": loss_weights["mel_diversification_loss"]
        * mel_diversification_loss,
        "f0_consistency_loss": loss_weights["f0_consistency_loss"] * f0_consistency_loss,
        "f0_diversification_loss": loss_weights["f0_diversification_loss"]
        * f0_diversification_loss,
    }

    # Epoch gating, identical to the reference loop.
    for key in list(loss_dict.keys()):
        if key in lce:
            loss_dict[key] = loss_dict[key] if current_epoch >= lce[key] else 0.0
        else:
            raise NotImplementedError(f"Loss function {key} is not supported.")

    loss_dict["total_loss"] = sum(loss_dict.values())
    return loss_dict


# -----------------------------------------------------------------------------
# Demo / self-test
# -----------------------------------------------------------------------------
if __name__ == "__main__":
    key = jax.random.PRNGKey(0)
    kB, kM, kT = 2, 16, 128        # batch, mel-bins, frames
    kD, kTq = 32, 64               # code-dim, quantized frames

    keys = jax.random.split(key, 8)
    original = jax.random.normal(keys[0], (kB, kM, kT), jnp.float32)
    reconstruction = original + 0.1 * jax.random.normal(keys[1], (kB, kM, kT), jnp.float32)
    conversion = original + 0.3 * jax.random.normal(keys[2], (kB, kM, kT), jnp.float32)

    encodings = [jax.random.normal(keys[3], (kB, kD, kTq), jnp.float32)]
    embeddings = [
        encodings[0] + 0.05 * jax.random.normal(keys[4], (kB, kD, kTq), jnp.float32)
    ]

    f0_original = jax.random.uniform(keys[5], (kB, kT), jnp.float32, 50.0, 300.0)
    f0_reconstruction = f0_original + 5.0 * jax.random.normal(keys[6], (kB, kT), jnp.float32)
    f0_conversion = f0_original + 20.0 * jax.random.normal(keys[7], (kB, kT), jnp.float32)

    loss_dict = perceptual_vqvae_vc_loss(
        original,
        reconstruction,
        conversion,
        encodings,
        embeddings,
        f0_original,
        f0_reconstruction,
        f0_conversion,
        current_epoch=1,
    )
    total = jax.block_until_ready(loss_dict["total_loss"])

    # Lightweight pure-JAX reference check (forward values).
    w = default_loss_weights()
    ref_rec = jnp.mean((reconstruction - original) ** 2)
    ref_cb = jnp.mean((embeddings[0] - encodings[0]) ** 2)
    ref_mel = -jnp.mean(jnp.abs(conversion - original))
    voiced = (f0_original >= 80.0).astype(jnp.float32)
    ref_f0d = -(jnp.sum(jnp.abs(f0_conversion - f0_original) * voiced) / jnp.sum(voiced))
    ref_total = (
        w["reconstruction_loss"] * ref_rec
        + w["codebook_loss"] * ref_cb
        + w["commitment_loss"] * ref_cb
        + w["mel_diversification_loss"] * ref_mel
        + w["f0_diversification_loss"] * ref_f0d
    )
    assert jnp.allclose(total, ref_total, rtol=1e-3, atol=1e-3), (total, ref_total)

    print("KERNEL_OK")
</pallas_src>

<mosaic_0001>
module attributes {stable_mosaic.version = 11 : i64} {
  func.func @kernel(%arg0: i32, %arg1: memref<32x128xf32, #tpu.memory_space<vmem>>, %arg2: memref<32x128xf32, #tpu.memory_space<vmem>>, %arg3: memref<32x128xf32, #tpu.memory_space<vmem>>, %arg4: memref<2x32x64xf32, #tpu.memory_space<vmem>>, %arg5: memref<2x32x64xf32, #tpu.memory_space<vmem>>, %arg6: memref<2x128xf32, #tpu.memory_space<vmem>>, %arg7: memref<2x128xf32, #tpu.memory_space<vmem>>, %arg8: memref<1x8x128xf32, #tpu.memory_space<vmem>>) attributes {dimension_semantics = [#tpu.dimension_semantics<parallel>], iteration_bounds = array<i64: 1>, scalar_prefetch = 0 : i64, scratch_operands = 0 : i64, tpu.core_type = #tpu.core_type<tc>, window_params = [{transform_indices = @transform_0, window_bounds = array<i64: 32, 128>}, {transform_indices = @transform_1, window_bounds = array<i64: 32, 128>}, {transform_indices = @transform_2, window_bounds = array<i64: 32, 128>}, {pipeline_mode = #tpu.pipeline_mode<synchronous>, transform_indices = @transform_3, window_bounds = array<i64: 2, 32, 64>}, {pipeline_mode = #tpu.pipeline_mode<synchronous>, transform_indices = @transform_4, window_bounds = array<i64: 2, 32, 64>}, {pipeline_mode = #tpu.pipeline_mode<synchronous>, transform_indices = @transform_5, window_bounds = array<i64: 2, 128>}, {pipeline_mode = #tpu.pipeline_mode<synchronous>, transform_indices = @transform_6, window_bounds = array<i64: 2, 128>}, {transform_indices = @transform_7, window_bounds = array<i64: 1, 8, 128>}]} {
    %c0 = arith.constant 0 : index
    %c0_0 = arith.constant 0 : index
    %0 = vector.load %arg1[%c0, %c0_0] : memref<32x128xf32, #tpu.memory_space<vmem>>, vector<32x128xf32>
    %c0_1 = arith.constant 0 : index
    %c0_2 = arith.constant 0 : index
    %1 = vector.load %arg2[%c0_1, %c0_2] : memref<32x128xf32, #tpu.memory_space<vmem>>, vector<32x128xf32>
    %2 = arith.subf %1, %0 : vector<32x128xf32>
    %c0_3 = arith.constant 0 : index
    %c0_4 = arith.constant 0 : index
    %3 = vector.load %arg3[%c0_3, %c0_4] : memref<32x128xf32, #tpu.memory_space<vmem>>, vector<32x128xf32>
    %4 = arith.subf %3, %0 : vector<32x128xf32>
    %5 = arith.mulf %2, %2 : vector<32x128xf32>
    %6 = vector.shape_cast %5 : vector<32x128xf32> to vector<1x32x128xf32>
    %cst = arith.constant dense<0.000000e+00> : vector<1xf32>
    %7 = vector.multi_reduction <add>, %6, %cst [1, 2] : vector<1x32x128xf32> to vector<1xf32>
    %8 = vector.shape_cast %7 : vector<1xf32> to vector<1x1x1xf32>
    %9 = vector.extract %8[0, 0, 0] : f32 from vector<1x1x1xf32>
    %10 = math.absf %4 : vector<32x128xf32>
    %11 = vector.shape_cast %10 : vector<32x128xf32> to vector<1x32x128xf32>
    %cst_5 = arith.constant dense<0.000000e+00> : vector<1xf32>
    %12 = vector.multi_reduction <add>, %11, %cst_5 [1, 2] : vector<1x32x128xf32> to vector<1xf32>
    %13 = vector.shape_cast %12 : vector<1xf32> to vector<1x1x1xf32>
    %14 = vector.extract %13[0, 0, 0] : f32 from vector<1x1x1xf32>
    %c0_6 = arith.constant 0 : index
    %c0_7 = arith.constant 0 : index
    %c0_8 = arith.constant 0 : index
    %15 = vector.load %arg5[%c0_6, %c0_7, %c0_8] : memref<2x32x64xf32, #tpu.memory_space<vmem>>, vector<2x32x64xf32>
    %c0_9 = arith.constant 0 : index
    %c0_10 = arith.constant 0 : index
    %c0_11 = arith.constant 0 : index
    %16 = vector.load %arg4[%c0_9, %c0_10, %c0_11] : memref<2x32x64xf32, #tpu.memory_space<vmem>>, vector<2x32x64xf32>
    %17 = arith.subf %15, %16 : vector<2x32x64xf32>
    %18 = arith.mulf %17, %17 : vector<2x32x64xf32>
    %19 = vector.shape_cast %18 : vector<2x32x64xf32> to vector<1x2x32x64xf32>
    %cst_12 = arith.constant dense<0.000000e+00> : vector<1xf32>
    %20 = vector.multi_reduction <add>, %19, %cst_12 [1, 2, 3] : vector<1x2x32x64xf32> to vector<1xf32>
    %21 = vector.shape_cast %20 : vector<1xf32> to vector<1x1x1x1xf32>
    %22 = vector.extract %21[0, 0, 0, 0] : f32 from vector<1x1x1x1xf32>
    %c0_13 = arith.constant 0 : index
    %c0_14 = arith.constant 0 : index
    %23 = vector.load %arg6[%c0_13, %c0_14] : memref<2x128xf32, #tpu.memory_space<vmem>>, vector<2x128xf32>
    %c0_15 = arith.constant 0 : index
    %c0_16 = arith.constant 0 : index
    %24 = vector.load %arg7[%c0_15, %c0_16] : memref<2x128xf32, #tpu.memory_space<vmem>>, vector<2x128xf32>
    %cst_17 = arith.constant 8.000000e+01 : f32
    %25 = vector.broadcast %cst_17 : f32 to vector<2x128xf32>
    %26 = arith.cmpf oge, %23, %25 : vector<2x128xf32>
    %27 = arith.extui %26 : vector<2x128xi1> to vector<2x128xi32>
    %28 = arith.sitofp %27 : vector<2x128xi32> to vector<2x128xf32>
    %29 = vector.shape_cast %28 : vector<2x128xf32> to vector<1x2x128xf32>
    %cst_18 = arith.constant dense<0.000000e+00> : vector<1xf32>
    %30 = vector.multi_reduction <add>, %29, %cst_18 [1, 2] : vector<1x2x128xf32> to vector<1xf32>
    %31 = vector.shape_cast %30 : vector<1xf32> to vector<1x1x1xf32>
    %32 = vector.extract %31[0, 0, 0] : f32 from vector<1x1x1xf32>
    %33 = arith.subf %24, %23 : vector<2x128xf32>
    %34 = math.absf %33 : vector<2x128xf32>
    %35 = arith.mulf %34, %28 : vector<2x128xf32>
    %36 = vector.shape_cast %35 : vector<2x128xf32> to vector<1x2x128xf32>
    %cst_19 = arith.constant dense<0.000000e+00> : vector<1xf32>
    %37 = vector.multi_reduction <add>, %36, %cst_19 [1, 2] : vector<1x2x128xf32> to vector<1xf32>
    %38 = vector.shape_cast %37 : vector<1xf32> to vector<1x1x1xf32>
    %39 = vector.extract %38[0, 0, 0] : f32 from vector<1x1x1xf32>
    %40 = tpu.iota {dimensions = array<i32: 0>} : vector<8x128xi32>
    %41 = tpu.iota {dimensions = array<i32: 1>} : vector<8x128xi32>
    %cst_20 = arith.constant 0.000000e+00 : f32
    %42 = vector.broadcast %cst_20 : f32 to vector<8x128xf32>
    %c0_i32 = arith.constant 0 : i32
    %43 = vector.broadcast %c0_i32 : i32 to vector<8x128xi32>
    %44 = arith.cmpi eq, %40, %43 : vector<8x128xi32>
    %c0_i32_21 = arith.constant 0 : i32
    %45 = vector.broadcast %c0_i32_21 : i32 to vector<8x128xi32>
    %46 = arith.cmpi eq, %41, %45 : vector<8x128xi32>
    %47 = arith.andi %44, %46 : vector<8x128xi1>
    %48 = vector.broadcast %9 : f32 to vector<8x128xf32>
    %49 = arith.select %47, %48, %42 : vector<8x128xi1>, vector<8x128xf32>
    %c0_i32_22 = arith.constant 0 : i32
    %50 = vector.broadcast %c0_i32_22 : i32 to vector<8x128xi32>
    %51 = arith.cmpi eq, %40, %50 : vector<8x128xi32>
    %c1_i32 = arith.constant 1 : i32
    %52 = vector.broadcast %c1_i32 : i32 to vector<8x128xi32>
    %53 = arith.cmpi eq, %41, %52 : vector<8x128xi32>
    %54 = arith.andi %51, %53 : vector<8x128xi1>
    %55 = vector.broadcast %14 : f32 to vector<8x128xf32>
    %56 = arith.select %54, %55, %49 : vector<8x128xi1>, vector<8x128xf32>
    %c0_i32_23 = arith.constant 0 : i32
    %57 = vector.broadcast %c0_i32_23 : i32 to vector<8x128xi32>
    %58 = arith.cmpi eq, %40, %57 : vector<8x128xi32>
    %c2_i32 = arith.constant 2 : i32
    %59 = vector.broadcast %c2_i32 : i32 to vector<8x128xi32>
    %60 = arith.cmpi eq, %41, %59 : vector<8x128xi32>
    %61 = arith.andi %58, %60 : vector<8x128xi1>
    %62 = vector.broadcast %22 : f32 to vector<8x128xf32>
    %63 = arith.select %61, %62, %56 : vector<8x128xi1>, vector<8x128xf32>
    %c0_i32_24 = arith.constant 0 : i32
    %64 = vector.broadcast %c0_i32_24 : i32 to vector<8x128xi32>
    %65 = arith.cmpi eq, %40, %64 : vector<8x128xi32>
    %c3_i32 = arith.constant 3 : i32
    %66 = vector.broadcast %c3_i32 : i32 to vector<8x128xi32>
    %67 = arith.cmpi eq, %41, %66 : vector<8x128xi32>
    %68 = arith.andi %65, %67 : vector<8x128xi1>
    %69 = vector.broadcast %32 : f32 to vector<8x128xf32>
    %70 = arith.select %68, %69, %63 : vector<8x128xi1>, vector<8x128xf32>
    %c0_i32_25 = arith.constant 0 : i32
    %71 = vector.broadcast %c0_i32_25 : i32 to vector<8x128xi32>
    %72 = arith.cmpi eq, %40, %71 : vector<8x128xi32>
    %c4_i32 = arith.constant 4 : i32
    %73 = vector.broadcast %c4_i32 : i32 to vector<8x128xi32>
    %74 = arith.cmpi eq, %41, %73 : vector<8x128xi32>
    %75 = arith.andi %72, %74 : vector<8x128xi1>
    %76 = vector.broadcast %39 : f32 to vector<8x128xf32>
    %77 = arith.select %75, %76, %70 : vector<8x128xi1>, vector<8x128xf32>
    %c0_26 = arith.constant 0 : index
    %c0_27 = arith.constant 0 : index
    %c0_28 = arith.constant 0 : index
    %78 = vector.load %arg8[%c0_26, %c0_27, %c0_28] : memref<1x8x128xf32, #tpu.memory_space<vmem>>, vector<1x8x128xf32>
    %79 = vector.shape_cast %78 : vector<1x8x128xf32> to vector<8x128xf32>
    %80 = vector.shape_cast %77 : vector<8x128xf32> to vector<1x8x128xf32>
    tpu.vector_store %arg8[%c0_26, %c0_27, %c0_28], %80 {strides = array<i32>} : memref<1x8x128xf32, #tpu.memory_space<vmem>>, vector<1x8x128xf32>,
    return
  }
  func.func @transform_0(%arg0: i32) -> (i32, i32) {
    %c0_i32 = arith.constant 0 : i32
    %c0_i32_0 = arith.constant 0 : i32
    return %arg0, %c0_i32 : i32, i32
  }
  func.func @transform_1(%arg0: i32) -> (i32, i32) {
    %c0_i32 = arith.constant 0 : i32
    %c0_i32_0 = arith.constant 0 : i32
    return %arg0, %c0_i32 : i32, i32
  }
  func.func @transform_2(%arg0: i32) -> (i32, i32) {
    %c0_i32 = arith.constant 0 : i32
    %c0_i32_0 = arith.constant 0 : i32
    return %arg0, %c0_i32 : i32, i32
  }
  func.func @transform_3(%arg0: i32) -> (i32, i32, i32) {
    %c0_i32 = arith.constant 0 : i32
    %c0_i32_0 = arith.constant 0 : i32
    %c0_i32_1 = arith.constant 0 : i32
    %c0_i32_2 = arith.constant 0 : i32
    return %c0_i32, %c0_i32_0, %c0_i32_1 : i32, i32, i32
  }
  func.func @transform_4(%arg0: i32) -> (i32, i32, i32) {
    %c0_i32 = arith.constant 0 : i32
    %c0_i32_0 = arith.constant 0 : i32
    %c0_i32_1 = arith.constant 0 : i32
    %c0_i32_2 = arith.constant 0 : i32
    return %c0_i32, %c0_i32_0, %c0_i32_1 : i32, i32, i32
  }
  func.func @transform_5(%arg0: i32) -> (i32, i32) {
    %c0_i32 = arith.constant 0 : i32
    %c0_i32_0 = arith.constant 0 : i32
    %c0_i32_1 = arith.constant 0 : i32
    return %c0_i32, %c0_i32_0 : i32, i32
  }
  func.func @transform_6(%arg0: i32) -> (i32, i32) {
    %c0_i32 = arith.constant 0 : i32
    %c0_i32_0 = arith.constant 0 : i32
    %c0_i32_1 = arith.constant 0 : i32
    return %c0_i32, %c0_i32_0 : i32, i32
  }
  func.func @transform_7(%arg0: i32) -> (i32, i32, i32) {
    %c0_i32 = arith.constant 0 : i32
    %c0_i32_0 = arith.constant 0 : i32
    %c0_i32_1 = arith.constant 0 : i32
    return %arg0, %c0_i32, %c0_i32_0 : i32, i32, i32
  }
}

</mosaic_0001>

<llo_original>
// kernel: tpu_custom_call.1
$region0: #{tpu_custom_call.1}
  #allocation0 [shape = 'u32[]', space=smem, size = 0x4, offset = 0x4, fixed_abs, tag = 'smem constant byte address 0x4 - core index']
  #allocation1 [shape = 'u32[144,128]{1,0:T(1,128)}', space=vmem, size = 0x12000, scoped, tag = 'internal scratch']
  %s0 = inlined_call_operand.hbm [shape: f32[32,128], index: 0, kind: input, shape index: {}]
  %s1 = inlined_call_operand.hbm [shape: f32[32,128], index: 1, kind: input, shape index: {}]
  %s2 = inlined_call_operand.hbm [shape: f32[32,128], index: 2, kind: input, shape index: {}]
  %s3 = inlined_call_operand.hbm [shape: f32[2,32,64], index: 3, kind: input, shape index: {}]
  %s4 = inlined_call_operand.hbm [shape: f32[2,32,64], index: 4, kind: input, shape index: {}]
  %s5 = inlined_call_operand.vmem [shape: f32[2,128], index: 5, kind: input, shape index: {}]
  %s6 = inlined_call_operand.vmem [shape: f32[2,128], index: 6, kind: input, shape index: {}]
  %s7 = inlined_call_operand.hbm [shape: f32[1,8,128], index: 7, kind: output, shape index: {}]
  %s8 = sld [smem:[#allocation0]]
  $region58: #{tpu_custom_call.1} parent=0
    _
  %s10 = ssub.s32 1, %s8
  %s11 = scalar_select 0, %s10, %s8
  $region1: #{tpu_custom_call.1} parent=0
    #allocation2 [shape = 'u8[16384]{0}', space=vmem, size = 0x4000, scoped, tag = 'input window, operand 0, single buffered']
    #allocation3 [shape = 's32[1]{0}', space=sflag, size = 0x4, scoped, tag = 'scoped memory for tpu_custom_call.1']
    #allocation4 [shape = 's32[1]{0}', space=sflag, size = 0x4, scoped, tag = 'scoped memory for tpu_custom_call.1']
    #allocation5 [shape = 'u8[16384]{0}', space=vmem, size = 0x4000, scoped, tag = 'input window, operand 1, single buffered']
    #allocation6 [shape = 's32[1]{0}', space=sflag, size = 0x4, scoped, tag = 'scoped memory for tpu_custom_call.1']
    #allocation7 [shape = 'u8[16384]{0}', space=vmem, size = 0x4000, scoped, tag = 'input window, operand 2, single buffered']
    #allocation8 [shape = 'u8[32768]{0}', space=vmem, size = 0x8000, scoped, tag = 'input window, operand 3, single buffered']
    #allocation9 [shape = 's32[1]{0}', space=sflag, size = 0x4, scoped, tag = 'scoped memory for tpu_custom_call.1']
    #allocation10 [shape = 'u8[32768]{0}', space=vmem, size = 0x8000, scoped, tag = 'input window, operand 4, single buffered']
    #allocation11 [shape = 'u8[4096]{0}', space=vmem, size = 0x1000, scoped, tag = 'output window, operand 0, single buffered']
    %12 = vsyncpa [#allocation3], 0
    %13 = vsyncpa [#allocation6], 0
    %14 = vsyncpa [#allocation9], 0
    %15 = vsyncpa [#allocation4], 0
    // Predicated region
    $region2: #{tpu_custom_call.1} parent=1 // pred_check
      _
    $region3: #{tpu_custom_call.1} parent=1 // pred_check_branch
      %17 = sbr.rel (0) target = $region5
    $region4: #{tpu_custom_call.1} parent=1 // pred_region
      %s19 = ssub.s32 512, 512
      %20 = vsyncadd [#allocation3], %s19
      %s21 = sshll.u32 [#allocation2], 4
      %s22 = int_to_ptr.vmem [resolvable:$true] %s21
      %27 = dma.hbm_to_vmem [thread:$0]  %s0, 512, %s22, [#allocation3], 128, 128, 8
    $region5: #{tpu_custom_call.1} parent=1 // pred_fallthru
      _
    // Predicated region
    $region6: #{tpu_custom_call.1} parent=1 // pred_check
      _
    $region7: #{tpu_custom_call.1} parent=1 // pred_check_branch
      %29 = sbr.rel (0) target = $region9
    $region8: #{tpu_custom_call.1} parent=1 // pred_region
      %s31 = ssub.s32 512, 512
      %32 = vsyncadd [#allocation6], %s31
      %s33 = sshll.u32 [#allocation5], 4
      %s34 = int_to_ptr.vmem [resolvable:$true] %s33
      %39 = dma.hbm_to_vmem [thread:$0]  %s1, 512, %s34, [#allocation6], 128, 128, 8
    $region9: #{tpu_custom_call.1} parent=1 // pred_fallthru
      _
    // Predicated region
    $region10: #{tpu_custom_call.1} parent=1 // pred_check
      _
    $region11: #{tpu_custom_call.1} parent=1 // pred_check_branch
      %41 = sbr.rel (0) target = $region13
    $region12: #{tpu_custom_call.1} parent=1 // pred_region
      %s43 = ssub.s32 512, 512
      %44 = vsyncadd [#allocation6], %s43
      %s45 = sshll.u32 [#allocation7], 4
      %s46 = int_to_ptr.vmem [resolvable:$true] %s45
      %51 = dma.hbm_to_vmem [thread:$0]  %s2, 512, %s46, [#allocation6], 128, 128, 8
    $region13: #{tpu_custom_call.1} parent=1 // pred_fallthru
      _
    // Predicated region
    $region14: #{tpu_custom_call.1} parent=1 // pred_check
      _
    $region15: #{tpu_custom_call.1} parent=1 // pred_check_branch
      %53 = sbr.rel (0) target = $region17
    $region16: #{tpu_custom_call.1} parent=1 // pred_region
      %s55 = ssub.s32 1024, 1024
      %56 = vsyncadd [#allocation9], %s55
      %s57 = sshll.u32 [#allocation8], 4
      %s58 = int_to_ptr.vmem [resolvable:$true] %s57
      %63 = dma.hbm_to_vmem [thread:$0]  %s3, 1024, %s58, [#allocation9], 128, 128, 8
    $region17: #{tpu_custom_call.1} parent=1 // pred_fallthru
      _
    // Predicated region
    $region18: #{tpu_custom_call.1} parent=1 // pred_check
      _
    $region19: #{tpu_custom_call.1} parent=1 // pred_check_branch
      %65 = sbr.rel (0) target = $region21
    $region20: #{tpu_custom_call.1} parent=1 // pred_region
      %s67 = ssub.s32 1024, 1024
      %68 = vsyncadd [#allocation9], %s67
      %s69 = sshll.u32 [#allocation10], 4
      %s70 = int_to_ptr.vmem [resolvable:$true] %s69
      %75 = dma.hbm_to_vmem [thread:$0]  %s4, 1024, %s70, [#allocation9], 128, 128, 8
    $region21: #{tpu_custom_call.1} parent=1 // pred_fallthru
      _
    // Predicated region
    $region22: #{tpu_custom_call.1} parent=1 // pred_check
      _
    $region23: #{tpu_custom_call.1} parent=1 // pred_check_branch
      %77 = sbr.rel (0) target = $region25
    $region24: #{tpu_custom_call.1} parent=1 // pred_region
      _
    $region25: #{tpu_custom_call.1} parent=1 // pred_fallthru
      _
    // Predicated region
    $region26: #{tpu_custom_call.1} parent=1 // pred_check
      _
    $region27: #{tpu_custom_call.1} parent=1 // pred_check_branch
      %79 = sbr.rel (0) target = $region29
    $region28: #{tpu_custom_call.1} parent=1 // pred_region
      _
    $region29: #{tpu_custom_call.1} parent=1 // pred_fallthru
      _
    // Predicated region
    $region30: #{tpu_custom_call.1} parent=1 // pred_check
      _
    $region31: #{tpu_custom_call.1} parent=1 // pred_check_branch
      %81 = sbr.rel (0) target = $region33
    $region32: #{tpu_custom_call.1} parent=1 // pred_region
      %82 = dma.done [#allocation3], 512
    $region33: #{tpu_custom_call.1} parent=1 // pred_fallthru
      _
    // Predicated region
    $region34: #{tpu_custom_call.1} parent=1 // pred_check
      _
    $region35: #{tpu_custom_call.1} parent=1 // pred_check_branch
      %84 = sbr.rel (0) target = $region37
    $region36: #{tpu_custom_call.1} parent=1 // pred_region
      %85 = dma.done [#allocation6], 512
    $region37: #{tpu_custom_call.1} parent=1 // pred_fallthru
      _
    // Predicated region
    $region38: #{tpu_custom_call.1} parent=1 // pred_check
      _
    $region39: #{tpu_custom_call.1} parent=1 // pred_check_branch
      %87 = sbr.rel (0) target = $region41
    $region40: #{tpu_custom_call.1} parent=1 // pred_region
      %88 = dma.done [#allocation6], 512
    $region41: #{tpu_custom_call.1} parent=1 // pred_fallthru
      _
    // Predicated region
    $region42: #{tpu_custom_call.1} parent=1 // pred_check
      _
    $region43: #{tpu_custom_call.1} parent=1 // pred_check_branch
      %90 = sbr.rel (0) target = $region45
    $region44: #{tpu_custom_call.1} parent=1 // pred_region
      %91 = dma.done [#allocation9], 1024
    $region45: #{tpu_custom_call.1} parent=1 // pred_fallthru
      _
    // Predicated region
    $region46: #{tpu_custom_call.1} parent=1 // pred_check
      _
    $region47: #{tpu_custom_call.1} parent=1 // pred_check_branch
      %93 = sbr.rel (0) target = $region49
    $region48: #{tpu_custom_call.1} parent=1 // pred_region
      %94 = dma.done [#allocation9], 1024
    $region49: #{tpu_custom_call.1} parent=1 // pred_fallthru
      _
    %v95 = vld [vmem:[#allocation2] sm:$0xff]
    %v96 = vld [vmem:[#allocation2 + $0x8] sm:$0xff]
    %v97 = vld [vmem:[#allocation2 + $0x10] sm:$0xff]
    %v98 = vld [vmem:[#allocation2 + $0x18] sm:$0xff]
    %v99 = vld [vmem:[#allocation5] sm:$0xff]
    %v100 = vld [vmem:[#allocation5 + $0x8] sm:$0xff]
    %v101 = vld [vmem:[#allocation5 + $0x10] sm:$0xff]
    %v102 = vld [vmem:[#allocation5 + $0x18] sm:$0xff]
    %v103 = vsub.f32 %v99, %v95
    %v104 = vsub.f32 %v100, %v96
    %v105 = vsub.f32 %v101, %v97
    %v106 = vsub.f32 %v102, %v98
    %v107 = vld [vmem:[#allocation7] sm:$0xff]
    %v108 = vld [vmem:[#allocation7 + $0x8] sm:$0xff]
    %v109 = vld [vmem:[#allocation7 + $0x10] sm:$0xff]
    %v110 = vld [vmem:[#allocation7 + $0x18] sm:$0xff]
    %v111 = vsub.f32 %v107, %v95
    %v112 = vsub.f32 %v108, %v96
    %v113 = vsub.f32 %v109, %v97
    %v114 = vsub.f32 %v110, %v98
    %v115 = vmul.f32 %v103, %v103
    %v116 = vmul.f32 %v104, %v104
    %v117 = vmul.f32 %v105, %v105
    %v118 = vmul.f32 %v106, %v106
    %v119 = vadd.f32 %v115, %v116
    %v120 = vadd.f32 %v119, %v117
    %v121 = vadd.f32 %v120, %v118
    %122 = vadd.xlane.f32.xlu0 %v121
    %v123 = vpop.xlane.xlu0 %122
    %v124 = vrot.slane %v123, 4
    %v125 = vadd.f32 %v123, %v124
    %v126 = vrot.slane %v125, 2
    %v127 = vadd.f32 %v125, %v126
    %v128 = vrot.slane %v127, 1
    %v129 = vadd.f32 %v127, %v128
    %s130 = vtos %v129
    %v131 = vand.u32 2147483647, %v111
    %v132 = vand.u32 2147483647, %v112
    %v133 = vand.u32 2147483647, %v113
    %v134 = vand.u32 2147483647, %v114
    %v135 = vadd.f32 %v131, %v132
    %v136 = vadd.f32 %v135, %v133
    %v137 = vadd.f32 %v136, %v134
    %138 = vadd.xlane.f32.xlu0 %v137
    %v139 = vpop.xlane.xlu0 %138
    %v140 = vrot.slane %v139, 4
    %v141 = vadd.f32 %v139, %v140
    %v142 = vrot.slane %v141, 2
    %v143 = vadd.f32 %v141, %v142
    %v144 = vrot.slane %v143, 1
    %v145 = vadd.f32 %v143, %v144
    %s146 = vtos %v145
    %v147 = vld [vmem:[#allocation10] sm:$0xff]
    %v148 = vld [vmem:[#allocation10 + $0x8] sm:$0xff]
    %v149 = vld [vmem:[#allocation10 + $0x10] sm:$0xff]
    %v150 = vld [vmem:[#allocation10 + $0x18] sm:$0xff]
    %v151 = vld [vmem:[#allocation10 + $0x20] sm:$0xff]
    %v152 = vld [vmem:[#allocation10 + $0x28] sm:$0xff]
    %v153 = vld [vmem:[#allocation10 + $0x30] sm:$0xff]
    %v154 = vld [vmem:[#allocation10 + $0x38] sm:$0xff]
    %v155 = vld [vmem:[#allocation8] sm:$0xff]
    %v156 = vld [vmem:[#allocation8 + $0x8] sm:$0xff]
    %v157 = vld [vmem:[#allocation8 + $0x10] sm:$0xff]
    %v158 = vld [vmem:[#allocation8 + $0x18] sm:$0xff]
    %v159 = vld [vmem:[#allocation8 + $0x20] sm:$0xff]
    %v160 = vld [vmem:[#allocation8 + $0x28] sm:$0xff]
    %v161 = vld [vmem:[#allocation8 + $0x30] sm:$0xff]
    %v162 = vld [vmem:[#allocation8 + $0x38] sm:$0xff]
    %v163 = vsub.f32 %v147, %v155
    %v164 = vsub.f32 %v148, %v156
    %v165 = vsub.f32 %v149, %v157
    %v166 = vsub.f32 %v150, %v158
    %v167 = vsub.f32 %v151, %v159
    %v168 = vsub.f32 %v152, %v160
    %v169 = vsub.f32 %v153, %v161
    %v170 = vsub.f32 %v154, %v162
    %v171 = vmul.f32 %v163, %v163
    %v172 = vmul.f32 %v164, %v164
    %v173 = vmul.f32 %v165, %v165
    %v174 = vmul.f32 %v166, %v166
    %v175 = vmul.f32 %v167, %v167
    %v176 = vmul.f32 %v168, %v168
    %v177 = vmul.f32 %v169, %v169
    %v178 = vmul.f32 %v170, %v170
    %vm179 = vcmask 523264
    %v180 = vsel %vm179, %v171, 0.0
    %v181 = vsel %vm179, %v172, 0.0
    %v182 = vadd.f32 %v180, %v181
    %v183 = vsel %vm179, %v173, 0.0
    %v184 = vadd.f32 %v182, %v183
    %v185 = vsel %vm179, %v174, 0.0
    %v186 = vadd.f32 %v184, %v185
    %v187 = vsel %vm179, %v175, 0.0
    %v188 = vadd.f32 %v186, %v187
    %v189 = vsel %vm179, %v176, 0.0
    %v190 = vadd.f32 %v188, %v189
    %v191 = vsel %vm179, %v177, 0.0
    %v192 = vadd.f32 %v190, %v191
    %v193 = vsel %vm179, %v178, 0.0
    %v194 = vadd.f32 %v192, %v193
    %195 = vadd.xlane.f32.xlu0 %v194
    %v196 = vpop.xlane.xlu0 %195
    %v197 = vrot.slane %v196, 4
    %v198 = vadd.f32 %v196, %v197
    %v199 = vrot.slane %v198, 2
    %v200 = vadd.f32 %v198, %v199
    %v201 = vrot.slane %v200, 1
    %v202 = vadd.f32 %v200, %v201
    %s203 = vtos %v202
    %v204 = vld [vmem:[%s5] sm:$0x3]
    %v205 = vld [vmem:[%s6] sm:$0x3]
    %vm206 = vcmp.ge.f32.partialorder %v204, 80.0
    %v207 = vsel %vm206, 1, 0
    %v208 = vcvt.s32.f32 %v207
    %vm209 = vcmask 1041408
    %v210 = vsel %vm209, %v208, 0.0
    %211 = vadd.xlane.f32.xlu0 %v210
    %v212 = vpop.xlane.xlu0 %211
    %v213 = vrot.slane %v212, 4
    %v214 = vadd.f32 %v212, %v213
    %v215 = vrot.slane %v214, 2
    %v216 = vadd.f32 %v214, %v215
    %v217 = vrot.slane %v216, 1
    %v218 = vadd.f32 %v216, %v217
    %s219 = vtos %v218
    %v220 = vsub.f32 %v205, %v204
    %v221 = vand.u32 2147483647, %v220
    %v222 = vmul.f32 %v221, %v208
    %v223 = vsel %vm209, %v222, 0.0
    %224 = vadd.xlane.f32.xlu0 %v223
    %v225 = vpop.xlane.xlu0 %224
    %v226 = vrot.slane %v225, 4
    %v227 = vadd.f32 %v225, %v226
    %v228 = vrot.slane %v227, 2
    %v229 = vadd.f32 %v227, %v228
    %v230 = vrot.slane %v229, 1
    %v231 = vadd.f32 %v229, %v230
    %s232 = vtos %v231
    %v233 = vlaneseq
    %v234 = vshrl.u32 %v233, 7
    %v235 = vlaneseq
    %v236 = vand.u32 %v235, 127
    %vm237 = vcmp.eq.s32.totalorder %v234, 0
    %vm238 = vcmp.eq.s32.totalorder %v236, 0
    %vm239 = vmand %vm237, %vm238
    %v240 = vstv %s130
    %v241 = vsel %vm239, %v240, 0.0
    %vm242 = vcmp.eq.s32.totalorder %v236, 1
    %vm243 = vmand %vm237, %vm242
    %v244 = vstv %s146
    %v245 = vsel %vm243, %v244, %v241
    %vm246 = vcmp.eq.s32.totalorder %v236, 2
    %vm247 = vmand %vm237, %vm246
    %v248 = vstv %s203
    %v249 = vsel %vm247, %v248, %v245
    %vm250 = vcmp.eq.s32.totalorder %v236, 3
    %vm251 = vmand %vm237, %vm250
    %v252 = vstv %s219
    %v253 = vsel %vm251, %v252, %v249
    %vm254 = vcmp.eq.s32.totalorder %v236, 4
    %vm255 = vmand %vm237, %vm254
    %v256 = vstv %s232
    %v257 = vsel %vm255, %v256, %v253
    %258 = vst [vmem:[#allocation11] sm:$0xff] %v257
    // Predicated region
    $region50: #{tpu_custom_call.1} parent=1 // pred_check
      _
    $region51: #{tpu_custom_call.1} parent=1 // pred_check_branch
      %260 = sbr.rel (0) target = $region53
    $region52: #{tpu_custom_call.1} parent=1 // pred_region
      %s262 = ssub.s32 128, 128
      %263 = vsyncadd [#allocation4], %s262
      %s265 = sshll.u32 [#allocation11], 4
      %s266 = int_to_ptr.vmem [resolvable:$true] %s265
      %268 = dma.vmem_to_hbm [thread:$0]  %s266, 128, %s7, [#allocation4]
    $region53: #{tpu_custom_call.1} parent=1 // pred_fallthru
      _
    // Predicated region
    $region54: #{tpu_custom_call.1} parent=1 // pred_check
      _
    $region55: #{tpu_custom_call.1} parent=1 // pred_check_branch
      %270 = sbr.rel (0) target = $region57
    $region56: #{tpu_custom_call.1} parent=1 // pred_region
      %271 = dma.done [#allocation4], 128
    $region57: #{tpu_custom_call.1} parent=1 // pred_fallthru
      _
    %272 = vsyncpa [#allocation3], 1
    %273 = vsyncpa [#allocation6], 1
    %274 = vsyncpa [#allocation9], 1
    %275 = vsyncpa [#allocation4], 1

</llo_original>
